<compile_context>
chip_gen: v6e
topology: v6e:2x2x1
jax: 0.10.0
libtpu: 0.0.40
codegen_flags: <defaults>
</compile_context>

<pallas_src>
import math
import functools

import jax
import jax.numpy as jnp
from jax.experimental import pallas as pl
from jax.experimental.pallas import tpu as pltpu


_EPS = 1e-12  # torch.nn.functional.normalize default eps


def _round_up(a: int, b: int) -> int:
    return (a + b - 1) // b * b


# --------------------------------------------------------------------------
# Kernels
# --------------------------------------------------------------------------
def _cosine_kernel_single(xs_ref, ws_ref, x_ref, w_ref, o_ref):
    # Single K step: raw bf16 matmul on the MXU (f32 accumulation), then apply
    # the hoisted row/class scales and store the lane-dense output tile.
    acc = jnp.dot(x_ref[...], w_ref[...], preferred_element_type=jnp.float32)
    o_ref[...] = (acc * xs_ref[...] * ws_ref[...]).astype(o_ref.dtype)


def _cosine_kernel_multi(xs_ref, ws_ref, x_ref, w_ref, o_ref, acc_ref):
    k = pl.program_id(2)

    @pl.when(k == 0)
    def _init():
        acc_ref[...] = jnp.zeros_like(acc_ref)

    acc_ref[...] += jnp.dot(
        x_ref[...], w_ref[...], preferred_element_type=jnp.float32
    )

    @pl.when(k == pl.num_programs(2) - 1)
    def _finalize():
        o_ref[...] = (acc_ref[...] * xs_ref[...] * ws_ref[...]).astype(o_ref.dtype)


# --------------------------------------------------------------------------
# Per-call forward (x-side work only; weight side is pre-processed & cached)
# --------------------------------------------------------------------------
@functools.partial(
    jax.jit, static_argnames=("tn", "tk", "num_classes", "out_dtype")
)
def _cosine_forward(x, w_t_p, w_scale_p, *, tn, tk, num_classes, out_dtype):
    B, F = x.shape
    Fp, Cp = w_t_p.shape

    # Row inverse norms in f32 BEFORE the bf16 cast (keeps normalization exact).
    x_f32 = x.astype(jnp.float32)
    x_scale = 1.0 / jnp.maximum(
        jnp.sqrt(jnp.sum(x_f32 * x_f32, axis=1, keepdims=True)), _EPS
    )  # (B, 1) f32

    tm = min(512, _round_up(B, 8))
    Bp = _round_up(B, tm)

    # bf16 in HBM (halves DMA traffic); pad fused with the cast.
    x_p = jnp.pad(x_f32, ((0, Bp - B), (0, Fp - F))).astype(jnp.bfloat16)
    # Padded batch rows get scale 0 -> their (padded) logits are exactly 0.
    x_scale_p = jnp.pad(x_scale, ((0, Bp - B), (0, 0)))

    # Keep both v7x TensorCores busy when the natural parallel grid is 1x1.
    tn_eff = tn
    if Bp // tm == 1 and Cp // tn_eff == 1 and tn_eff % 256 == 0:
        tn_eff //= 2

    nbi, nbj, nbk = Bp // tm, Cp // tn_eff, Fp // tk

    if nbk == 1:
        # Whole reduction in one tile: no K grid axis, no accumulator scratch.
        grid = (nbi, nbj)
        kernel = _cosine_kernel_single
        in_specs = [
            pl.BlockSpec((tm, 1), lambda i, j: (i, 0)),         # 1/||x|| rows
            pl.BlockSpec((1, tn_eff), lambda i, j: (0, j)),      # sigma/||w||
            pl.BlockSpec((tm, tk), lambda i, j: (i, 0)),         # x tile (bf16)
            pl.BlockSpec((tk, tn_eff), lambda i, j: (0, j)),     # W^T tile (bf16)
        ]
        out_spec = pl.BlockSpec((tm, tn_eff), lambda i, j: (i, j))
        scratch = []
        dims = ("parallel", "parallel")
    else:
        grid = (nbi, nbj, nbk)
        kernel = _cosine_kernel_multi
        in_specs = [
            pl.BlockSpec((tm, 1), lambda i, j, k: (i, 0)),
            pl.BlockSpec((1, tn_eff), lambda i, j, k: (0, j)),
            pl.BlockSpec((tm, tk), lambda i, j, k: (i, k)),
            pl.BlockSpec((tk, tn_eff), lambda i, j, k: (k, j)),
        ]
        out_spec = pl.BlockSpec((tm, tn_eff), lambda i, j, k: (i, j))
        scratch = [pltpu.VMEM((tm, tn_eff), jnp.float32)]
        dims = ("parallel", "parallel", "arbitrary")

    out_p = pl.pallas_call(
        kernel,
        out_shape=jax.ShapeDtypeStruct((Bp, Cp), out_dtype),
        grid_spec=pltpu.PrefetchScalarGridSpec(
            num_scalar_prefetch=0,
            grid=grid,
            in_specs=in_specs,
            out_specs=out_spec,
            scratch_shapes=scratch,
        ),
        compiler_params=pltpu.CompilerParams(
            dimension_semantics=dims,
            vmem_limit_bytes=32 * 1024 * 1024,  # fits v5e/v6e/v7x scoped VMEM
        ),
    )(x_scale_p, w_scale_p, x_p, w_t_p)

    return out_p[:B, :num_classes]


# --------------------------------------------------------------------------
# Factory: caches all weight-side preprocessing across calls
# --------------------------------------------------------------------------
def make_cosine_classifier(weight, sigma=None, *, out_dtype=None):
    """Build fn(x) = sigma * normalize(x, dim=1) @ normalize(weight, dim=1).T.

    weight: [C, F] f32, sigma: scalar (or None).  Padding, transpose, bf16
    cast, per-class inverse norms and the sigma fold are done once here.
    """
    weight = jnp.asarray(weight, jnp.float32)
    C, F = weight.shape

    Cp0 = _round_up(C, 128)
    Fp0 = _round_up(F, 128)
    # W-resident fast path: whole padded bf16 weight stays in VMEM, DMA'd once,
    # single K step, 1-D grid over batch tiles.
    if Fp0 <= 4096 and Cp0 * Fp0 * 2 <= 6 * 1024 * 1024:
        tn, tk = Cp0, Fp0
    else:
        tn = min(512, Cp0)
        tk = min(2048, Fp0)
    Cp = _round_up(C, tn)
    Fp = _round_up(F, tk)

    # Per-class sigma/||w|| in f32 (padded classes get 0 -> padded logits 0).
    w_scale = 1.0 / jnp.maximum(jnp.sqrt(jnp.sum(weight * weight, axis=1)), _EPS)
    if sigma is not None:
        w_scale = w_scale * jnp.asarray(sigma, jnp.float32).reshape(())
    w_scale_p = jnp.pad(w_scale, (0, Cp - C)).reshape(1, Cp)

    # Pre-transposed (F, C) weight, padded once, stored bf16 for the MXU.
    w_t_p = jnp.pad(weight.T, ((0, Fp - F), (0, Cp - C))).astype(jnp.bfloat16)

    def apply(x):
        od = out_dtype if out_dtype is not None else x.dtype
        return _cosine_forward(
            x, w_t_p, w_scale_p, tn=tn, tk=tk, num_classes=C, out_dtype=od
        )

    return apply


# --------------------------------------------------------------------------
# Self-test
# --------------------------------------------------------------------------
if __name__ == "__main__":
    # Small shapes consistent with CosineClassifier(outplanes, numclass).
    # NOTE: at this toy size the kernel is pure launch overhead; the tiling
    # logic above targets realistic B/F/C in the hundreds-to-thousands.
    batch = 8
    outplanes = 32   # in_features
    numclass = 16    # out_features

    key = jax.random.PRNGKey(0)
    kx, kw = jax.random.split(key)

    # Deterministic parameter init, mirroring Cosine.reset_parameters()
    stdv = 1.0 / math.sqrt(outplanes)
    weight = jax.random.uniform(
        kw, (numclass, outplanes), minval=-stdv, maxval=stdv, dtype=jnp.float32
    )
    sigma = jnp.ones((1,), dtype=jnp.float32)
    x = jax.random.normal(kx, (batch, outplanes), dtype=jnp.float32)

    classifier = make_cosine_classifier(weight, sigma)
    out = jax.block_until_ready(classifier(x))

    # Pure-JAX f32 reference (matches the PyTorch module)
    def ref(x, w, s):
        xn = x / jnp.maximum(jnp.linalg.norm(x, axis=1, keepdims=True), 1e-12)
        wn = w / jnp.maximum(jnp.linalg.norm(w, axis=1, keepdims=True), 1e-12)
        return s[0] * (xn @ wn.T)

    expected = ref(x, weight, sigma)
    assert out.shape == (batch, numclass)
    # bf16 MXU operands with f32 accumulation: cosine logits are bounded by 1,
    # observed error is a few 1e-3 -> 2e-2 tolerance.
    max_err = jnp.max(jnp.abs(out - expected))
    assert jnp.allclose(out, expected, atol=2e-2, rtol=2e-2), max_err

    print("KERNEL_OK")
</pallas_src>

<mosaic_0001>
module attributes {stable_mosaic.version = 11 : i64} {
  func.func @_cosine_kernel_single(%arg0: i32, %arg1: i32, %arg2: memref<8x1xf32, #tpu.memory_space<vmem>>, %arg3: memref<1x128xf32, #tpu.memory_space<vmem>>, %arg4: memref<8x128xbf16, #tpu.memory_space<vmem>>, %arg5: memref<128x128xbf16, #tpu.memory_space<vmem>>, %arg6: memref<8x128xf32, #tpu.memory_space<vmem>>) attributes {dimension_semantics = [#tpu.dimension_semantics<parallel>, #tpu.dimension_semantics<parallel>], iteration_bounds = array<i64: 1, 1>, scalar_prefetch = 0 : i64, scratch_operands = 0 : i64, tpu.core_type = #tpu.core_type<tc>, window_params = [{transform_indices = @transform_0, window_bounds = array<i64: 8, 1>}, {transform_indices = @transform_1, window_bounds = array<i64: 1, 128>}, {transform_indices = @transform_2, window_bounds = array<i64: 8, 128>}, {transform_indices = @transform_3, window_bounds = array<i64: 128, 128>}, {transform_indices = @transform_4, window_bounds = array<i64: 8, 128>}]} {
    %c0 = arith.constant 0 : index
    %c0_0 = arith.constant 0 : index
    %0 = vector.load %arg4[%c0, %c0_0] : memref<8x128xbf16, #tpu.memory_space<vmem>>, vector<8x128xbf16>
    %c0_1 = arith.constant 0 : index
    %c0_2 = arith.constant 0 : index
    %1 = vector.load %arg5[%c0_1, %c0_2] : memref<128x128xbf16, #tpu.memory_space<vmem>>, vector<128x128xbf16>
    %cst = arith.constant dense<0.000000e+00> : vector<8x128xf32>
    %2 = tpu.matmul %0, %1, %cst {dimension_numbers = #tpu.dot_dimension_numbers<[1], [0], [0], [1], [0, 0, 1, 1], [], []>} : vector<8x128xbf16>, vector<128x128xbf16>, vector<8x128xf32> -> vector<8x128xf32>
    %c0_3 = arith.constant 0 : index
    %c0_4 = arith.constant 0 : index
    %3 = vector.load %arg2[%c0_3, %c0_4] : memref<8x1xf32, #tpu.memory_space<vmem>>, vector<8x1xf32>
    %4 = vector.broadcast %3 : vector<8x1xf32> to vector<8x128xf32>
    %5 = arith.mulf %2, %4 : vector<8x128xf32>
    %c0_5 = arith.constant 0 : index
    %c0_6 = arith.constant 0 : index
    %6 = vector.load %arg3[%c0_5, %c0_6] : memref<1x128xf32, #tpu.memory_space<vmem>>, vector<1x128xf32>
    %7 = vector.broadcast %6 : vector<1x128xf32> to vector<8x128xf32>
    %8 = arith.mulf %5, %7 : vector<8x128xf32>
    %c0_7 = arith.constant 0 : index
    %c0_8 = arith.constant 0 : index
    %9 = vector.load %arg6[%c0_7, %c0_8] : memref<8x128xf32, #tpu.memory_space<vmem>>, vector<8x128xf32>
    tpu.vector_store %arg6[%c0_7, %c0_8], %8 {strides = array<i32>} : memref<8x128xf32, #tpu.memory_space<vmem>>, vector<8x128xf32>,
    return
  }
  func.func @transform_0(%arg0: i32, %arg1: i32) -> (i32, i32) {
    %c0_i32 = arith.constant 0 : i32
    %c0_i32_0 = arith.constant 0 : i32
    return %arg0, %c0_i32 : i32, i32
  }
  func.func @transform_1(%arg0: i32, %arg1: i32) -> (i32, i32) {
    %c0_i32 = arith.constant 0 : i32
    %c0_i32_0 = arith.constant 0 : i32
    return %c0_i32, %arg1 : i32, i32
  }
  func.func @transform_2(%arg0: i32, %arg1: i32) -> (i32, i32) {
    %c0_i32 = arith.constant 0 : i32
    %c0_i32_0 = arith.constant 0 : i32
    return %arg0, %c0_i32 : i32, i32
  }
  func.func @transform_3(%arg0: i32, %arg1: i32) -> (i32, i32) {
    %c0_i32 = arith.constant 0 : i32
    %c0_i32_0 = arith.constant 0 : i32
    return %c0_i32, %arg1 : i32, i32
  }
  func.func @transform_4(%arg0: i32, %arg1: i32) -> (i32, i32) {
    %c0_i32 = arith.constant 0 : i32
    return %arg0, %arg1 : i32, i32
  }
}

</mosaic_0001>

<llo_original>
// kernel: _cosine_forward.1
$region0: #{_cosine_forward.1}
  #allocation0 [shape = 'u32[]', space=smem, size = 0x4, offset = 0x4, fixed_abs, tag = 'smem constant byte address 0x4 - core index']
  #allocation1 [shape = 'u32[144,128]{1,0:T(1,128)}', space=vmem, size = 0x12000, scoped, tag = 'internal scratch']
  %s0 = inlined_call_operand.vmem [shape: f32[8,1], index: 0, kind: input, shape index: {}]
  %s1 = inlined_call_operand.vmem [shape: f32[1,128], index: 1, kind: input, shape index: {}]
  %s2 = inlined_call_operand.vmem [shape: bf16[8,128], index: 2, kind: input, shape index: {}]
  %s3 = inlined_call_operand.hbm [shape: bf16[128,128], index: 3, kind: input, shape index: {}]
  %s4 = inlined_call_operand.hbm [shape: f32[8,128], index: 4, kind: output, shape index: {}]
  %s5 = sld [smem:[#allocation0]]
  $region30: #{_cosine_forward.1} parent=0
    _
  %s7 = ssub.s32 1, %s5
  %s8 = scalar_select 0, %s7, %s5
  $region1: #{_cosine_forward.1} parent=0
    #allocation2 [shape = 'u8[32768]{0}', space=vmem, size = 0x8000, scoped, tag = 'input window, operand 3, single buffered']
    #allocation3 [shape = 's32[1]{0}', space=sflag, size = 0x4, scoped, tag = 'scoped memory for _cosine_forward.1']
    #allocation4 [shape = 's32[1]{0}', space=sflag, size = 0x4, scoped, tag = 'scoped memory for _cosine_forward.1']
    #allocation5 [shape = 'u8[4096]{0}', space=vmem, size = 0x1000, scoped, tag = 'output window, operand 0, single buffered']
    %9 = vsyncpa [#allocation3], 0
    %10 = vsyncpa [#allocation4], 0
    // Predicated region
    $region2: #{_cosine_forward.1} parent=1 // pred_check
      _
    $region3: #{_cosine_forward.1} parent=1 // pred_check_branch
      %12 = sbr.rel (0) target = $region5
    $region4: #{_cosine_forward.1} parent=1 // pred_region
      _
    $region5: #{_cosine_forward.1} parent=1 // pred_fallthru
      _
    // Predicated region
    $region6: #{_cosine_forward.1} parent=1 // pred_check
      _
    $region7: #{_cosine_forward.1} parent=1 // pred_check_branch
      %14 = sbr.rel (0) target = $region9
    $region8: #{_cosine_forward.1} parent=1 // pred_region
      _
    $region9: #{_cosine_forward.1} parent=1 // pred_fallthru
      _
    // Predicated region
    $region10: #{_cosine_forward.1} parent=1 // pred_check
      _
    $region11: #{_cosine_forward.1} parent=1 // pred_check_branch
      %16 = sbr.rel (0) target = $region13
    $region12: #{_cosine_forward.1} parent=1 // pred_region
      _
    $region13: #{_cosine_forward.1} parent=1 // pred_fallthru
      _
    // Predicated region
    $region14: #{_cosine_forward.1} parent=1 // pred_check
      _
    $region15: #{_cosine_forward.1} parent=1 // pred_check_branch
      %18 = sbr.rel (0) target = $region17
    $region16: #{_cosine_forward.1} parent=1 // pred_region
      %s20 = ssub.s32 1024, 1024
      %21 = vsyncadd [#allocation3], %s20
      %s22 = sshll.u32 [#allocation2], 4
      %s23 = int_to_ptr.vmem [resolvable:$true] %s22
      %28 = dma.hbm_to_vmem [thread:$0]  %s3, 1024, %s23, [#allocation3], 64, 64, 4
    $region17: #{_cosine_forward.1} parent=1 // pred_fallthru
      _
    // Predicated region
    $region18: #{_cosine_forward.1} parent=1 // pred_check
      _
    $region19: #{_cosine_forward.1} parent=1 // pred_check_branch
      %30 = sbr.rel (0) target = $region21
    $region20: #{_cosine_forward.1} parent=1 // pred_region
      %31 = dma.done [#allocation3], 1024
    $region21: #{_cosine_forward.1} parent=1 // pred_fallthru
      _
    %v33 = vld [vmem:[%s2] sm:$0xf]
    %v34 = vld [vmem:[#allocation2] sm:$0xf]
    %v35 = vld [vmem:[#allocation2 + $0x4] sm:$0xf]
    %v36 = vld [vmem:[#allocation2 + $0x8] sm:$0xf]
    %v37 = vld [vmem:[#allocation2 + $0xc] sm:$0xf]
    %v38 = vld [vmem:[#allocation2 + $0x10] sm:$0xf]
    %v39 = vld [vmem:[#allocation2 + $0x14] sm:$0xf]
    %v40 = vld [vmem:[#allocation2 + $0x18] sm:$0xf]
    %v41 = vld [vmem:[#allocation2 + $0x1c] sm:$0xf]
    %v42 = vld [vmem:[#allocation2 + $0x20] sm:$0xf]
    %v43 = vld [vmem:[#allocation2 + $0x24] sm:$0xf]
    %v44 = vld [vmem:[#allocation2 + $0x28] sm:$0xf]
    %v45 = vld [vmem:[#allocation2 + $0x2c] sm:$0xf]
    %v46 = vld [vmem:[#allocation2 + $0x30] sm:$0xf]
    %v47 = vld [vmem:[#allocation2 + $0x34] sm:$0xf]
    %v48 = vld [vmem:[#allocation2 + $0x38] sm:$0xf]
    %v49 = vld [vmem:[#allocation2 + $0x3c] sm:$0xf]
    %v66 = vunpack.c.l.b16 %v34
    %v67 = vunpack.c.l.b16 %v35
    %v68 = vunpack.c.l.b16 %v36
    %v69 = vunpack.c.l.b16 %v37
    %v70 = vunpack.c.l.b16 %v38
    %v71 = vunpack.c.l.b16 %v39
    %v72 = vunpack.c.l.b16 %v40
    %v73 = vunpack.c.l.b16 %v41
    %v74 = vunpack.c.l.b16 %v42
    %v75 = vunpack.c.l.b16 %v43
    %v76 = vunpack.c.l.b16 %v44
    %v77 = vunpack.c.l.b16 %v45
    %v78 = vunpack.c.l.b16 %v46
    %v79 = vunpack.c.l.b16 %v47
    %v80 = vunpack.c.l.b16 %v48
    %v81 = vunpack.c.l.b16 %v49
    %v82 = vpack.c.b16 %v67, %v66
    %v83 = vpack.c.b16 %v69, %v68
    %v84 = vpack.c.b16 %v71, %v70
    %v85 = vpack.c.b16 %v73, %v72
    %v86 = vpack.c.b16 %v75, %v74
    %v87 = vpack.c.b16 %v77, %v76
    %v88 = vpack.c.b16 %v79, %v78
    %v89 = vpack.c.b16 %v81, %v80
    %98 = vmatprep.subr.bf16.mxu0 0
    %99 = vmatpush1.bf16.msra.mxu0 %v89
    %100 = vmatprep.subr.bf16.mxu0 0
    %101 = vmatpush1.bf16.msra.mxu0 %v88
    %102 = vmatprep.subr.bf16.mxu0 0
    %103 = vmatpush1.bf16.msra.mxu0 %v87
    %104 = vmatprep.subr.bf16.mxu0 0
    %105 = vmatpush1.bf16.msra.mxu0 %v86
    %106 = vmatprep.subr.bf16.mxu0 0
    %107 = vmatpush1.bf16.msra.mxu0 %v85
    %108 = vmatprep.subr.bf16.mxu0 0
    %109 = vmatpush1.bf16.msra.mxu0 %v84
    %110 = vmatprep.subr.bf16.mxu0 0
    %111 = vmatpush1.bf16.msra.mxu0 %v83
    %112 = vmatprep.subr.bf16.mxu0 0
    %113 = vmatpush1.bf16.msra.mxu0 %v82
    %114 = vmatprep.subr.bf16.mxu0 0
    %115 = vmatpush2.bf16.msra.mxu0 0
    %116 = vmatprep.subr.bf16.mxu0 0
    %117 = vmatpush2.bf16.msra.mxu0 0
    %118 = vmatprep.subr.bf16.mxu0 0
    %119 = vmatpush2.bf16.msra.mxu0 0
    %120 = vmatprep.subr.bf16.mxu0 0
    %121 = vmatpush2.bf16.msra.mxu0 0
    %122 = vmatprep.subr.bf16.mxu0 0
    %123 = vmatpush2.bf16.msra.mxu0 0
    %124 = vmatprep.subr.bf16.mxu0 0
    %125 = vmatpush2.bf16.msra.mxu0 0
    %126 = vmatprep.subr.bf16.mxu0 0
    %127 = vmatpush2.bf16.msra.mxu0 0
    %128 = vmatprep.subr.bf16.mxu0 0
    %129 = vmatpush2.bf16.msra.mxu0 0
    %130 = vmatprep.mubr.bf16.mxu0 0
    %131 = vmatmul.mubr.bf16.gmra.mxu0 %v33
    %v132 = vpop.f32.mrf.mxu0
    %v133 = vadd.f32 0.0, %v132
    %v134 = vpop.f32.mrf.mxu0
    %v135 = vpop.f32.mrf.mxu0
    %v136 = vpop.f32.mrf.mxu0
    %137 = vdwg.mxu0
    %v138 = vld [vmem:[%s0] sm:$0xff]
    %140 = vset.pattern.permute.xlu0 0
    %141 = vperm.xlu0 %140, %v138
    %v142 = vpop.permute.xlu0 %141
    %v144 = vmul.f32 %v133, %v142
    %v145 = vld [vmem:[%s1] sm:$0x1]
    %v147 = vlaneseq
    %v148 = vshrl.u32 %v147, 7
    %v149 = vsub.s32 0, %v148
    %v150 = vrot.slane %v145, %v149
    %v152 = vmul.f32 %v144, %v150
    %153 = vst [vmem:[#allocation5] sm:$0xff] %v152
    // Predicated region
    $region22: #{_cosine_forward.1} parent=1 // pred_check
      _
    $region23: #{_cosine_forward.1} parent=1 // pred_check_branch
      %155 = sbr.rel (0) target = $region25
    $region24: #{_cosine_forward.1} parent=1 // pred_region
      %s157 = ssub.s32 128, 128
      %158 = vsyncadd [#allocation4], %s157
      %s160 = sshll.u32 [#allocation5], 4
      %s161 = int_to_ptr.vmem [resolvable:$true] %s160
      %163 = dma.vmem_to_hbm [thread:$0]  %s161, 128, %s4, [#allocation4]
    $region25: #{_cosine_forward.1} parent=1 // pred_fallthru
      _
    // Predicated region
    $region26: #{_cosine_forward.1} parent=1 // pred_check
      _
    $region27: #{_cosine_forward.1} parent=1 // pred_check_branch
      %165 = sbr.rel (0) target = $region29
    $region28: #{_cosine_forward.1} parent=1 // pred_region
      %166 = dma.done [#allocation4], 128
    $region29: #{_cosine_forward.1} parent=1 // pred_fallthru
      _
    %167 = vsyncpa [#allocation3], 1
    %168 = vsyncpa [#allocation4], 1

</llo_original>
